<compile_context>
chip_gen: v7x
topology: tpu7x:2x2x1
jax: 0.10.0
libtpu: 0.0.40
codegen_flags: <defaults>
</compile_context>

<pallas_src>
import functools

import jax
import jax.numpy as jnp
from jax.experimental import pallas as pl
from jax.experimental.pallas import tpu as pltpu


def _cdiv(a, b):
    return -(-a // b)


def _round_up(a, b):
    return _cdiv(a, b) * b


def _tpu_flavor():
    """Best-effort TPU generation probe. Returns (is_v7, detected)."""
    try:
        kind = jax.devices()[0].device_kind.lower()
    except Exception:
        return False, False
    is_v7 = ("v7" in kind) or ("7x" in kind)
    return is_v7, True


def _ce_loss_kernel(y_ref, x_ref, o_ref, *, valid_rows, max_block, apply_mask):
    """Accumulates sum(log(x) * y) partials directly into the resident
    (1, 8, L) output block (output index is constant across the reduction
    axis, so it stays in VMEM until the slice finishes)."""
    i = pl.program_id(1)            # inner ("arbitrary") reduction axis

    @pl.when(i == 0)
    def _():
        o_ref[...] = jnp.zeros_like(o_ref)

    x = x_ref[...]
    y = y_ref[...]
    if x.dtype != jnp.float32:      # no-op for f32 inputs
        x = x.astype(jnp.float32)
    if y.dtype != jnp.float32:
        y = y.astype(jnp.float32)

    br, lane = x.shape

    def fold(contrib):
        # Fold rows in groups of 8 sublanes: pure VPU adds into a vreg-shaped
        # accumulator; the only cross-lane reduce happens once in the wrapper.
        return contrib.reshape(br // 8, 8, lane).sum(axis=0)[None]

    if not apply_mask:
        # No partial/clamped blocks anywhere in the grid: always fast path.
        o_ref[...] += fold(jnp.log(x) * y)
        return

    # Only the edge block (and its fully-clamped repeats) need masking; every
    # other grid step takes the unmasked fast path.
    logical = pl.program_id(0) * pl.num_programs(1) + i

    @pl.when(logical < max_block)
    def _():
        o_ref[...] += fold(jnp.log(x) * y)

    @pl.when(logical >= max_block)
    def _():
        row0 = logical * br
        rows = row0 + jax.lax.broadcasted_iota(jnp.int32, (br, 1), 0)
        mask = rows < valid_rows                         # (br, 1) column mask
        xs = jnp.where(mask, x, jnp.float32(1.0))        # keep log() finite
        contrib = jnp.where(mask, jnp.log(xs) * y, jnp.float32(0.0))
        o_ref[...] += fold(contrib)


def ce_loss(y, x, *, lane_width=1024):
    """Pallas implementation of CE_Loss.forward(y, x) = -sum(log(x)*y)/(H*W)."""
    assert y.shape == x.shape and x.ndim == 4, "expected NCHW tensors of equal shape"
    n, c, h, w = x.shape
    s = h * w
    total = n * c * h * w

    def _reference():
        xf = x.astype(jnp.float32)
        yf = y.astype(jnp.float32)
        return -jnp.sum(jnp.log(xf) * yf) / jnp.float32(s)

    # The kernel path requires total % 128 == 0 so the flat view reshapes to a
    # lane-dense (R, L) slab with no slicing/padding (a slice would make XLA
    # materialize a near-full HBM copy of both inputs — the big perf cliff).
    if total < 128 or total % 128 != 0:
        # TODO(synk): ragged element counts fall back to the fused XLA reduction.
        return _reference()

    # Largest L <= lane_width that is a multiple of 128 AND divides `total`
    # exactly; 128 always qualifies here, so rem == 0 by construction.
    max_lane = min(lane_width, total)
    L = 128
    for cand in range(max_lane - max_lane % 128, 127, -128):
        if total % cand == 0:
            L = cand
            break
    R = total // L

    x2 = x.reshape(R, L)            # pure metadata reshape, no copy
    y2 = y.reshape(R, L)

    # Row granularity: 8 for 4-byte dtypes, 16/32 for packed narrow dtypes.
    itemsize = jnp.dtype(x.dtype).itemsize
    packing = max(1, 4 // itemsize)
    row_mult = 8 * packing

    # Generation-aware budgets:
    #   v7x : 64 MiB VMEM/TC  -> ~4 MiB input tiles, 48 MiB limit, 2 TCs.
    #   v5e/v6e : 128 MiB VMEM -> ~8 MiB input tiles, 64 MiB limit, 1 TC grid.
    #   unknown : conservative (v7x-safe tiles, single core).
    is_v7, detected = _tpu_flavor()
    if is_v7:
        tile_budget, vmem_limit, num_cores = 4 << 20, 48 << 20, 2
    elif detected:
        tile_budget, vmem_limit, num_cores = 8 << 20, 64 << 20, 1
    else:
        tile_budget, vmem_limit, num_cores = 4 << 20, 48 << 20, 1

    # Byte-budget tile rows (keeps tile bytes constant even if L is small).
    br_budget = max(row_mult,
                    (tile_budget // (L * itemsize)) // row_mult * row_mult)
    br = min(br_budget, _round_up(R, row_mult))

    # Leading parallel axis: split rows across TensorCores only on v7x and
    # only when there is enough work; P = 1 otherwise.
    P = num_cores if (num_cores > 1 and R >= num_cores * br) else 1
    S = _cdiv(_cdiv(R, P), br)              # reduction steps per slice
    max_block = _cdiv(R, br) - 1            # clamp for fully-OOB edge blocks
    apply_mask = (P * S * br != R)

    in_index_map = lambda p, i: (jnp.minimum(p * S + i, max_block), 0)

    kernel = functools.partial(
        _ce_loss_kernel,
        valid_rows=R, max_block=max_block, apply_mask=apply_mask)

    partials = pl.pallas_call(
        kernel,
        out_shape=jax.ShapeDtypeStruct((P, 8, L), jnp.float32),
        grid_spec=pltpu.PrefetchScalarGridSpec(
            num_scalar_prefetch=0,
            grid=(P, S),
            in_specs=[
                pl.BlockSpec((br, L), in_index_map),   # y tile
                pl.BlockSpec((br, L), in_index_map),   # x tile
            ],
            out_specs=pl.BlockSpec((1, 8, L), lambda p, i: (p, 0, 0)),
        ),
        compiler_params=pltpu.CompilerParams(
            dimension_semantics=("parallel", "arbitrary"),
            vmem_limit_bytes=vmem_limit,
        ),
    )(y2, x2)

    return -jnp.sum(partials) / jnp.float32(s)


if __name__ == "__main__":
    key = jax.random.PRNGKey(0)
    k1, k2 = jax.random.split(key)

    N, C, H, W = 2, 4, 16, 16
    # x must be strictly positive (it is passed through log).
    x = jax.random.uniform(k1, (N, C, H, W), dtype=jnp.float32,
                           minval=0.1, maxval=1.0)
    y = jax.random.uniform(k2, (N, C, H, W), dtype=jnp.float32)

    loss = jax.block_until_ready(ce_loss(y, x))

    # Sanity check against a pure-JAX reference of the PyTorch forward.
    ref = -jnp.sum(jnp.log(x) * y) / (H * W)
    assert jnp.allclose(loss, ref, rtol=1e-5, atol=1e-5), (loss, ref)

    print("KERNEL_OK")
</pallas_src>

<mosaic_0001>
module attributes {stable_mosaic.version = 11 : i64} {
  func.func @_ce_loss_kernel(%arg0: i32, %arg1: i32, %arg2: memref<8x1024xf32, #tpu.memory_space<vmem>>, %arg3: memref<8x1024xf32, #tpu.memory_space<vmem>>, %arg4: memref<1x8x1024xf32, #tpu.memory_space<vmem>>) attributes {dimension_semantics = [#tpu.dimension_semantics<parallel>, #tpu.dimension_semantics<arbitrary>], iteration_bounds = array<i64: 1, 1>, scalar_prefetch = 0 : i64, scratch_operands = 0 : i64, tpu.core_type = #tpu.core_type<tc>, window_params = [{transform_indices = @transform_0, window_bounds = array<i64: 8, 1024>}, {transform_indices = @transform_1, window_bounds = array<i64: 8, 1024>}, {transform_indices = @transform_2, window_bounds = array<i64: 1, 8, 1024>}]} {
    %c0_i32 = arith.constant 0 : i32
    %0 = arith.cmpi eq, %arg1, %c0_i32 : i32
    %1 = arith.extui %0 : i1 to i32
    %c0_i32_0 = arith.constant 0 : i32
    %2 = arith.cmpi ne, %1, %c0_i32_0 : i32
    scf.if %2 {
      %cst = arith.constant 0.000000e+00 : f32
      %13 = vector.broadcast %cst : f32 to vector<1x8x1024xf32>
      %c0_8 = arith.constant 0 : index
      %c0_9 = arith.constant 0 : index
      %c0_10 = arith.constant 0 : index
      %14 = vector.load %arg4[%c0_8, %c0_9, %c0_10] : memref<1x8x1024xf32, #tpu.memory_space<vmem>>, vector<1x8x1024xf32>
      tpu.vector_store %arg4[%c0_8, %c0_9, %c0_10], %13 {strides = array<i32>} : memref<1x8x1024xf32, #tpu.memory_space<vmem>>, vector<1x8x1024xf32>,
    } else {
    }
    %c0 = arith.constant 0 : index
    %c0_1 = arith.constant 0 : index
    %3 = vector.load %arg3[%c0, %c0_1] : memref<8x1024xf32, #tpu.memory_space<vmem>>, vector<8x1024xf32>
    %c0_2 = arith.constant 0 : index
    %c0_3 = arith.constant 0 : index
    %4 = vector.load %arg2[%c0_2, %c0_3] : memref<8x1024xf32, #tpu.memory_space<vmem>>, vector<8x1024xf32>
    %c1_i32 = arith.constant 1 : i32
    %5 = arith.muli %arg0, %c1_i32 : i32
    %6 = arith.addi %5, %arg1 : i32
    %c0_i32_4 = arith.constant 0 : i32
    %7 = arith.cmpi slt, %6, %c0_i32_4 : i32
    %8 = arith.extui %7 : i1 to i32
    %c0_i32_5 = arith.constant 0 : i32
    %9 = arith.cmpi ne, %8, %c0_i32_5 : i32
    scf.if %9 {
      %c0_8 = arith.constant 0 : index
      %c0_9 = arith.constant 0 : index
      %c0_10 = arith.constant 0 : index
      %13 = vector.load %arg4[%c0_8, %c0_9, %c0_10] : memref<1x8x1024xf32, #tpu.memory_space<vmem>>, vector<1x8x1024xf32>
      %14 = math.log %3 : vector<8x1024xf32>
      %15 = arith.mulf %14, %4 : vector<8x1024xf32>
      %16 = vector.shape_cast %15 : vector<8x1024xf32> to vector<1x8x1024xf32>
      %cst = arith.constant dense<0.000000e+00> : vector<8x1024xf32>
      %17 = vector.multi_reduction <add>, %16, %cst [0] : vector<1x8x1024xf32> to vector<8x1024xf32>
      %18 = vector.shape_cast %17 : vector<8x1024xf32> to vector<1x8x1024xf32>
      %19 = arith.addf %13, %18 : vector<1x8x1024xf32>
      %c0_11 = arith.constant 0 : index
      %c0_12 = arith.constant 0 : index
      %c0_13 = arith.constant 0 : index
      %20 = vector.load %arg4[%c0_11, %c0_12, %c0_13] : memref<1x8x1024xf32, #tpu.memory_space<vmem>>, vector<1x8x1024xf32>
      tpu.vector_store %arg4[%c0_11, %c0_12, %c0_13], %19 {strides = array<i32>} : memref<1x8x1024xf32, #tpu.memory_space<vmem>>, vector<1x8x1024xf32>,
    } else {
    }
    %c0_i32_6 = arith.constant 0 : i32
    %10 = arith.cmpi sge, %6, %c0_i32_6 : i32
    %11 = arith.extui %10 : i1 to i32
    %c0_i32_7 = arith.constant 0 : i32
    %12 = arith.cmpi ne, %11, %c0_i32_7 : i32
    scf.if %12 {
      %c8_i32 = arith.constant 8 : i32
      %13 = arith.muli %6, %c8_i32 : i32
      %14 = tpu.iota {dimensions = array<i32: 0>} : vector<8x1xi32>
      %15 = vector.broadcast %13 : i32 to vector<8x1xi32>
      %16 = arith.addi %15, %14 : vector<8x1xi32>
      %c2_i32 = arith.constant 2 : i32
      %17 = vector.broadcast %c2_i32 : i32 to vector<8x1xi32>
      %18 = arith.cmpi slt, %16, %17 : vector<8x1xi32>
      %cst = arith.constant 1.000000e+00 : f32
      %19 = vector.shape_cast %18 : vector<8x1xi1> to vector<8x1xi1>
      %20 = vector.broadcast %19 : vector<8x1xi1> to vector<8x1024xi1>
      %21 = vector.broadcast %cst : f32 to vector<8x1024xf32>
      %22 = arith.select %20, %3, %21 : vector<8x1024xi1>, vector<8x1024xf32>
      %23 = math.log %22 : vector<8x1024xf32>
      %24 = arith.mulf %23, %4 : vector<8x1024xf32>
      %cst_8 = arith.constant 0.000000e+00 : f32
      %25 = vector.shape_cast %18 : vector<8x1xi1> to vector<8x1xi1>
      %26 = vector.broadcast %25 : vector<8x1xi1> to vector<8x1024xi1>
      %27 = vector.broadcast %cst_8 : f32 to vector<8x1024xf32>
      %28 = arith.select %26, %24, %27 : vector<8x1024xi1>, vector<8x1024xf32>
      %c0_9 = arith.constant 0 : index
      %c0_10 = arith.constant 0 : index
      %c0_11 = arith.constant 0 : index
      %29 = vector.load %arg4[%c0_9, %c0_10, %c0_11] : memref<1x8x1024xf32, #tpu.memory_space<vmem>>, vector<1x8x1024xf32>
      %30 = vector.shape_cast %28 : vector<8x1024xf32> to vector<1x8x1024xf32>
      %cst_12 = arith.constant dense<0.000000e+00> : vector<8x1024xf32>
      %31 = vector.multi_reduction <add>, %30, %cst_12 [0] : vector<1x8x1024xf32> to vector<8x1024xf32>
      %32 = vector.shape_cast %31 : vector<8x1024xf32> to vector<1x8x1024xf32>
      %33 = arith.addf %29, %32 : vector<1x8x1024xf32>
      %c0_13 = arith.constant 0 : index
      %c0_14 = arith.constant 0 : index
      %c0_15 = arith.constant 0 : index
      %34 = vector.load %arg4[%c0_13, %c0_14, %c0_15] : memref<1x8x1024xf32, #tpu.memory_space<vmem>>, vector<1x8x1024xf32>
      tpu.vector_store %arg4[%c0_13, %c0_14, %c0_15], %33 {strides = array<i32>} : memref<1x8x1024xf32, #tpu.memory_space<vmem>>, vector<1x8x1024xf32>,
    } else {
    }
    return
  }
  func.func @transform_0(%arg0: i32, %arg1: i32) -> (i32, i32) {
    %c1_i32 = arith.constant 1 : i32
    %0 = arith.muli %arg0, %c1_i32 : i32
    %1 = arith.addi %0, %arg1 : i32
    %c0_i32 = arith.constant 0 : i32
    %2 = arith.minsi %1, %c0_i32 : i32
    %c0_i32_0 = arith.constant 0 : i32
    %c0_i32_1 = arith.constant 0 : i32
    return %2, %c0_i32_0 : i32, i32
  }
  func.func @transform_1(%arg0: i32, %arg1: i32) -> (i32, i32) {
    %c1_i32 = arith.constant 1 : i32
    %0 = arith.muli %arg0, %c1_i32 : i32
    %1 = arith.addi %0, %arg1 : i32
    %c0_i32 = arith.constant 0 : i32
    %2 = arith.minsi %1, %c0_i32 : i32
    %c0_i32_0 = arith.constant 0 : i32
    %c0_i32_1 = arith.constant 0 : i32
    return %2, %c0_i32_0 : i32, i32
  }
  func.func @transform_2(%arg0: i32, %arg1: i32) -> (i32, i32, i32) {
    %c0_i32 = arith.constant 0 : i32
    %c0_i32_0 = arith.constant 0 : i32
    %c0_i32_1 = arith.constant 0 : i32
    return %arg0, %c0_i32, %c0_i32_0 : i32, i32, i32
  }
}

</mosaic_0001>

<llo_original>
// kernel: tpu_custom_call.1
$region0: #{tpu_custom_call.1}
  #allocation0 [shape = 'u32[]', space=smem, size = 0x4, offset = 0x4, fixed_abs, tag = 'smem constant byte address 0x4 - core index']
  #allocation1 [shape = 'u32[144,128]{1,0:T(1,128)}', space=vmem, size = 0x12000, scoped, tag = 'internal scratch']
  %s0 = inlined_call_operand.hbm [shape: f32[2,1024], index: 0, kind: input, shape index: {}]
  %s1 = inlined_call_operand.hbm [shape: f32[2,1024], index: 1, kind: input, shape index: {}]
  %s2 = inlined_call_operand.hbm [shape: f32[1,8,1024], index: 2, kind: output, shape index: {}]
  %s3 = sld [smem:[#allocation0]]
  $region38: #{tpu_custom_call.1} parent=0
    _
  %s5 = ssub.s32 1, %s3
  %s6 = scalar_select 0, %s5, %s3
  $region1: #{tpu_custom_call.1} parent=0
    #allocation2 [shape = 'u8[32768]{0}', space=vmem, size = 0x8000, scoped, tag = 'input window, operand 0, single buffered']
    #allocation3 [shape = 's32[1]{0}', space=sflag, size = 0x4, scoped, tag = 'scoped memory for tpu_custom_call.1']
    #allocation4 [shape = 's32[1]{0}', space=sflag, size = 0x4, scoped, tag = 'scoped memory for tpu_custom_call.1']
    #allocation5 [shape = 'u8[32768]{0}', space=vmem, size = 0x8000, scoped, tag = 'input window, operand 1, single buffered']
    #allocation6 [shape = 's32[1]{0}', space=sflag, size = 0x4, scoped, tag = 'scoped memory for tpu_custom_call.1']
    #allocation7 [shape = 'u8[32768]{0}', space=vmem, size = 0x8000, scoped, tag = 'output window, operand 0, single buffered']
    %7 = vsyncpa [#allocation3], 0
    %8 = vsyncpa [#allocation6], 0
    %9 = vsyncpa [#allocation4], 0
    // Predicated region
    $region2: #{tpu_custom_call.1} parent=1 // pred_check
      _
    $region3: #{tpu_custom_call.1} parent=1 // pred_check_branch
      %11 = sbr.rel (0) target = $region5
    $region4: #{tpu_custom_call.1} parent=1 // pred_region
      %s12 = sadd.s32 0, 0
      %p13 = scmp.lt.s32.totalorder %s12, 0
      %s14 = scalar_select %p13, %s12, 0
      %s15 = smul.u32 4, %s14
      %s16 = ssub.s32 1, %s15
      %s17 = smul.u32 32, %s16
      %s18 = smul.u32 %s17, 8
      %s20 = ssub.s32 1024, %s18
      %21 = vsyncadd [#allocation3], %s20
      %p22 = scmp.ne.s32.totalorder 0, %s18
      %s23 = smul.addr %s15, 8
      %s24 = smul.addr %s23, 32
      %s25 = scalar_lea.hbm %s0, %s24
      %s26 = smul.u32 16, %s16
      %s27 = sshll.u32 [#allocation2], 4
      %s28 = int_to_ptr.vmem [resolvable:$true] %s27
      %s29 = sshll.u32 %s26, 4
      %33 = dma.hbm_to_vmem [thread:$0]  (%p22), %s25, %s29, %s28, [#allocation3], 256, 256, 16
    $region5: #{tpu_custom_call.1} parent=1 // pred_fallthru
      _
    // Predicated region
    $region6: #{tpu_custom_call.1} parent=1 // pred_check
      _
    $region7: #{tpu_custom_call.1} parent=1 // pred_check_branch
      %35 = sbr.rel (0) target = $region9
    $region8: #{tpu_custom_call.1} parent=1 // pred_region
      %s36 = sadd.s32 0, 0
      %p37 = scmp.lt.s32.totalorder %s36, 0
      %s38 = scalar_select %p37, %s36, 0
      %s39 = smul.u32 4, %s38
      %s40 = ssub.s32 1, %s39
      %s41 = smul.u32 32, %s40
      %s42 = smul.u32 %s41, 8
      %s44 = ssub.s32 1024, %s42
      %45 = vsyncadd [#allocation6], %s44
      %p46 = scmp.ne.s32.totalorder 0, %s42
      %s47 = smul.addr %s39, 8
      %s48 = smul.addr %s47, 32
      %s49 = scalar_lea.hbm %s1, %s48
      %s50 = smul.u32 16, %s40
      %s51 = sshll.u32 [#allocation5], 4
      %s52 = int_to_ptr.vmem [resolvable:$true] %s51
      %s53 = sshll.u32 %s50, 4
      %57 = dma.hbm_to_vmem [thread:$0]  (%p46), %s49, %s53, %s52, [#allocation6], 256, 256, 16
    $region9: #{tpu_custom_call.1} parent=1 // pred_fallthru
      _
    // Predicated region
    $region10: #{tpu_custom_call.1} parent=1 // pred_check
      _
    $region11: #{tpu_custom_call.1} parent=1 // pred_check_branch
      %59 = sbr.rel (0) target = $region13
    $region12: #{tpu_custom_call.1} parent=1 // pred_region
      %60 = dma.done [#allocation3], 1024
    $region13: #{tpu_custom_call.1} parent=1 // pred_fallthru
      _
    // Predicated region
    $region14: #{tpu_custom_call.1} parent=1 // pred_check
      _
    $region15: #{tpu_custom_call.1} parent=1 // pred_check_branch
      %62 = sbr.rel (0) target = $region17
    $region16: #{tpu_custom_call.1} parent=1 // pred_region
      %63 = dma.done [#allocation6], 1024
    $region17: #{tpu_custom_call.1} parent=1 // pred_fallthru
      _
    %s64 = sadd.s32 0, 0
    %p65 = scmp.lt.s32.totalorder %s64, 0
    %s66 = scalar_select %p65, %s64, 0
    %s67 = smul.u32 4, %s66
    %s68 = ssub.s32 1, %s67
    %s69 = smul.u32 32, %s68
    %s70 = smul.u32 %s69, 8
    %s71 = sadd.s32 0, 0
    %p72 = scmp.lt.s32.totalorder %s71, 0
    %s73 = scalar_select %p72, %s71, 0
    %s74 = smul.u32 4, %s73
    %s75 = ssub.s32 1, %s74
    %s76 = smul.u32 32, %s75
    %s77 = smul.u32 %s76, 8
    %p78 = scmp.eq.s32.totalorder 0, 0
    // Predicated region
    $region18: #{tpu_custom_call.1} parent=1 // pred_check
      %p79 = pneg %p78
    $region19: #{tpu_custom_call.1} parent=1 // pred_check_branch
      %81 = sbr.rel (%p79) target = $region21
    $region20: #{tpu_custom_call.1} parent=1 // pred_region
      %82 = vst [vmem:[#allocation7] sm:$0xff] 0.0
      %83 = vst [vmem:[#allocation7 + $0x8] sm:$0xff] 0.0
      %84 = vst [vmem:[#allocation7 + $0x10] sm:$0xff] 0.0
      %85 = vst [vmem:[#allocation7 + $0x18] sm:$0xff] 0.0
      %86 = vst [vmem:[#allocation7 + $0x20] sm:$0xff] 0.0
      %87 = vst [vmem:[#allocation7 + $0x28] sm:$0xff] 0.0
      %88 = vst [vmem:[#allocation7 + $0x30] sm:$0xff] 0.0
      %89 = vst [vmem:[#allocation7 + $0x38] sm:$0xff] 0.0
    $region21: #{tpu_custom_call.1} parent=1 // pred_fallthru
      _
    %v90 = vld [vmem:[#allocation5] sm:$0xff]
    %v91 = vld [vmem:[#allocation5 + $0x8] sm:$0xff]
    %v92 = vld [vmem:[#allocation5 + $0x10] sm:$0xff]
    %v93 = vld [vmem:[#allocation5 + $0x18] sm:$0xff]
    %v94 = vld [vmem:[#allocation5 + $0x20] sm:$0xff]
    %v95 = vld [vmem:[#allocation5 + $0x28] sm:$0xff]
    %v96 = vld [vmem:[#allocation5 + $0x30] sm:$0xff]
    %v97 = vld [vmem:[#allocation5 + $0x38] sm:$0xff]
    %v98 = vld [vmem:[#allocation2] sm:$0xff]
    %v99 = vld [vmem:[#allocation2 + $0x8] sm:$0xff]
    %v100 = vld [vmem:[#allocation2 + $0x10] sm:$0xff]
    %v101 = vld [vmem:[#allocation2 + $0x18] sm:$0xff]
    %v102 = vld [vmem:[#allocation2 + $0x20] sm:$0xff]
    %v103 = vld [vmem:[#allocation2 + $0x28] sm:$0xff]
    %v104 = vld [vmem:[#allocation2 + $0x30] sm:$0xff]
    %v105 = vld [vmem:[#allocation2 + $0x38] sm:$0xff]
    %s106 = sadd.s32 0, 0
    %p107 = scmp.lt.s32.totalorder %s106, 0
    // Predicated region
    $region22: #{tpu_custom_call.1} parent=1 // pred_check
      %p108 = pneg %p107
    $region23: #{tpu_custom_call.1} parent=1 // pred_check_branch
      %110 = sbr.rel (%p108) target = $region25
    $region24: #{tpu_custom_call.1} parent=1 // pred_region
      %v111 = vld [vmem:[#allocation7] sm:$0xff]
      %v112 = vld [vmem:[#allocation7 + $0x8] sm:$0xff]
      %v113 = vld [vmem:[#allocation7 + $0x10] sm:$0xff]
      %v114 = vld [vmem:[#allocation7 + $0x18] sm:$0xff]
      %v115 = vld [vmem:[#allocation7 + $0x20] sm:$0xff]
      %v116 = vld [vmem:[#allocation7 + $0x28] sm:$0xff]
      %v117 = vld [vmem:[#allocation7 + $0x30] sm:$0xff]
      %v118 = vld [vmem:[#allocation7 + $0x38] sm:$0xff]
      %v119 = vlog2.pop %v90
      %v120 = vmul.f32 %v119, 0.6931472
      %v121 = vlog2.pop %v91
      %v122 = vmul.f32 %v121, 0.6931472
      %v123 = vlog2.pop %v92
      %v124 = vmul.f32 %v123, 0.6931472
      %v125 = vlog2.pop %v93
      %v126 = vmul.f32 %v125, 0.6931472
      %v127 = vlog2.pop %v94
      %v128 = vmul.f32 %v127, 0.6931472
      %v129 = vlog2.pop %v95
      %v130 = vmul.f32 %v129, 0.6931472
      %v131 = vlog2.pop %v96
      %v132 = vmul.f32 %v131, 0.6931472
      %v133 = vlog2.pop %v97
      %v134 = vmul.f32 %v133, 0.6931472
      %v135 = vmul.f32 %v120, %v98
      %v136 = vmul.f32 %v122, %v99
      %v137 = vmul.f32 %v124, %v100
      %v138 = vmul.f32 %v126, %v101
      %v139 = vmul.f32 %v128, %v102
      %v140 = vmul.f32 %v130, %v103
      %v141 = vmul.f32 %v132, %v104
      %v142 = vmul.f32 %v134, %v105
      %v143 = vadd.f32 %v135, 0.0
      %v144 = vadd.f32 %v136, 0.0
      %v145 = vadd.f32 %v137, 0.0
      %v146 = vadd.f32 %v138, 0.0
      %v147 = vadd.f32 %v139, 0.0
      %v148 = vadd.f32 %v140, 0.0
      %v149 = vadd.f32 %v141, 0.0
      %v150 = vadd.f32 %v142, 0.0
      %v159 = vcombine.low %v143, %v145
      %v160 = vcombine.high %v143, %v145
      %v161 = vcombine.low %v147, %v149
      %v162 = vcombine.high %v147, %v149
      %v164 = vunpack.c.l.s4 1983009808
      %v165 = vunpack.c.0.s8 %v164
      %v166 = vlaneseq
      %v167 = vshrl.u32 %v166, 7
      %v168 = vsub.s32 %v165, %v167
      %v169 = vrot.slane %v159, %v168
      %v171 = vunpack.c.l.s4 1983009808
      %v172 = vunpack.c.0.s8 %v171
      %v173 = vlaneseq
      %v174 = vshrl.u32 %v173, 7
      %v175 = vsub.s32 %v172, %v174
      %v176 = vrot.slane %v160, %v175
      %v178 = vunpack.c.l.s4 1983009808
      %v179 = vunpack.c.0.s8 %v178
      %v180 = vlaneseq
      %v181 = vshrl.u32 %v180, 7
      %v182 = vsub.s32 %v179, %v181
      %v183 = vrot.slane %v161, %v182
      %v185 = vunpack.c.l.s4 1983009808
      %v186 = vunpack.c.0.s8 %v185
      %v187 = vlaneseq
      %v188 = vshrl.u32 %v187, 7
      %v189 = vsub.s32 %v186, %v188
      %v190 = vrot.slane %v162, %v189
      %v191 = vcombine.low %v169, %v183
      %v192 = vcombine.high %v169, %v183
      %v193 = vcombine.low %v176, %v190
      %v194 = vcombine.high %v176, %v190
      %v195 = vcombine.low %v144, %v146
      %v196 = vcombine.high %v144, %v146
      %v197 = vcombine.low %v148, %v150
      %v198 = vcombine.high %v148, %v150
      %v200 = vunpack.c.l.s4 1983009808
      %v201 = vunpack.c.0.s8 %v200
      %v202 = vlaneseq
      %v203 = vshrl.u32 %v202, 7
      %v204 = vsub.s32 %v201, %v203
      %v205 = vrot.slane %v195, %v204
      %v207 = vunpack.c.l.s4 1983009808
      %v208 = vunpack.c.0.s8 %v207
      %v209 = vlaneseq
      %v210 = vshrl.u32 %v209, 7
      %v211 = vsub.s32 %v208, %v210
      %v212 = vrot.slane %v196, %v211
      %v214 = vunpack.c.l.s4 1983009808
      %v215 = vunpack.c.0.s8 %v214
      %v216 = vlaneseq
      %v217 = vshrl.u32 %v216, 7
      %v218 = vsub.s32 %v215, %v217
      %v219 = vrot.slane %v197, %v218
      %v221 = vunpack.c.l.s4 1983009808
      %v222 = vunpack.c.0.s8 %v221
      %v223 = vlaneseq
      %v224 = vshrl.u32 %v223, 7
      %v225 = vsub.s32 %v222, %v224
      %v226 = vrot.slane %v198, %v225
      %v227 = vcombine.low %v205, %v219
      %v228 = vcombine.high %v205, %v219
      %v229 = vcombine.low %v212, %v226
      %v230 = vcombine.high %v212, %v226
      %v239 = vadd.f32 %v111, %v191
      %v240 = vadd.f32 %v112, %v192
      %v241 = vadd.f32 %v113, %v193
      %v242 = vadd.f32 %v114, %v194
      %v243 = vadd.f32 %v115, %v227
      %v244 = vadd.f32 %v116, %v228
      %v245 = vadd.f32 %v117, %v229
      %v246 = vadd.f32 %v118, %v230
      %247 = vst [vmem:[#allocation7] sm:$0xff] %v239
      %248 = vst [vmem:[#allocation7 + $0x8] sm:$0xff] %v240
      %249 = vst [vmem:[#allocation7 + $0x10] sm:$0xff] %v241
      %250 = vst [vmem:[#allocation7 + $0x18] sm:$0xff] %v242
      %251 = vst [vmem:[#allocation7 + $0x20] sm:$0xff] %v243
      %252 = vst [vmem:[#allocation7 + $0x28] sm:$0xff] %v244
      %253 = vst [vmem:[#allocation7 + $0x30] sm:$0xff] %v245
      %254 = vst [vmem:[#allocation7 + $0x38] sm:$0xff] %v246
    $region25: #{tpu_custom_call.1} parent=1 // pred_fallthru
      _
    %p255 = scmp.ge.s32.totalorder %s106, 0
    // Predicated region
    $region26: #{tpu_custom_call.1} parent=1 // pred_check
      %p256 = pneg %p255
    $region27: #{tpu_custom_call.1} parent=1 // pred_check_branch
      %258 = sbr.rel (%p256) target = $region29
    $region28: #{tpu_custom_call.1} parent=1 // pred_region
      %s259 = smul.u32 %s106, 8
      %v260 = vlaneseq
      %v261 = vshrl.u32 %v260, 7
      %v262 = vstv %s259
      %v263 = vadd.s32 %v262, %v261
      %vm264 = vcmp.lt.s32.totalorder %v263, 2
      %v265 = vsel %vm264, 1, 0
      %vm266 = vcmp.eq.s32.totalorder %v265, 1
      %v275 = vcombine.low %v90, %v92
      %v276 = vcombine.high %v90, %v92
      %v277 = vcombine.low %v94, %v96
      %v278 = vcombine.high %v94, %v96
      %v280 = vunpack.c.l.s4 1983009808
      %v281 = vunpack.c.0.s8 %v280
      %v282 = vlaneseq
      %v283 = vshrl.u32 %v282, 7
      %v284 = vsub.s32 %v281, %v283
      %v285 = vrot.slane %v275, %v284
      %v287 = vunpack.c.l.s4 1983009808
      %v288 = vunpack.c.0.s8 %v287
      %v289 = vlaneseq
      %v290 = vshrl.u32 %v289, 7
      %v291 = vsub.s32 %v288, %v290
      %v292 = vrot.slane %v276, %v291
      %v294 = vunpack.c.l.s4 1983009808
      %v295 = vunpack.c.0.s8 %v294
      %v296 = vlaneseq
      %v297 = vshrl.u32 %v296, 7
      %v298 = vsub.s32 %v295, %v297
      %v299 = vrot.slane %v277, %v298
      %v301 = vunpack.c.l.s4 1983009808
      %v302 = vunpack.c.0.s8 %v301
      %v303 = vlaneseq
      %v304 = vshrl.u32 %v303, 7
      %v305 = vsub.s32 %v302, %v304
      %v306 = vrot.slane %v278, %v305
      %v307 = vcombine.low %v285, %v299
      %v308 = vcombine.high %v285, %v299
      %v309 = vcombine.low %v292, %v306
      %v310 = vcombine.high %v292, %v306
      %v311 = vcombine.low %v91, %v93
      %v312 = vcombine.high %v91, %v93
      %v313 = vcombine.low %v95, %v97
      %v314 = vcombine.high %v95, %v97
      %v316 = vunpack.c.l.s4 1983009808
      %v317 = vunpack.c.0.s8 %v316
      %v318 = vlaneseq
      %v319 = vshrl.u32 %v318, 7
      %v320 = vsub.s32 %v317, %v319
      %v321 = vrot.slane %v311, %v320
      %v323 = vunpack.c.l.s4 1983009808
      %v324 = vunpack.c.0.s8 %v323
      %v325 = vlaneseq
      %v326 = vshrl.u32 %v325, 7
      %v327 = vsub.s32 %v324, %v326
      %v328 = vrot.slane %v312, %v327
      %v330 = vunpack.c.l.s4 1983009808
      %v331 = vunpack.c.0.s8 %v330
      %v332 = vlaneseq
      %v333 = vshrl.u32 %v332, 7
      %v334 = vsub.s32 %v331, %v333
      %v335 = vrot.slane %v313, %v334
      %v337 = vunpack.c.l.s4 1983009808
      %v338 = vunpack.c.0.s8 %v337
      %v339 = vlaneseq
      %v340 = vshrl.u32 %v339, 7
      %v341 = vsub.s32 %v338, %v340
      %v342 = vrot.slane %v314, %v341
      %v343 = vcombine.low %v321, %v335
      %v344 = vcombine.high %v321, %v335
      %v345 = vcombine.low %v328, %v342
      %v346 = vcombine.high %v328, %v342
      %v355 = vsel %vm266, %v307, 1.0
      %v356 = vsel %vm266, %v308, 1.0
      %v357 = vsel %vm266, %v309, 1.0
      %v358 = vsel %vm266, %v310, 1.0
      %v359 = vsel %vm266, %v343, 1.0
      %v360 = vsel %vm266, %v344, 1.0
      %v361 = vsel %vm266, %v345, 1.0
      %v362 = vsel %vm266, %v346, 1.0
      %v363 = vlog2.pop %v355
      %v364 = vmul.f32 %v363, 0.6931472
      %v365 = vlog2.pop %v356
      %v366 = vmul.f32 %v365, 0.6931472
      %v367 = vlog2.pop %v357
      %v368 = vmul.f32 %v367, 0.6931472
      %v369 = vlog2.pop %v358
      %v370 = vmul.f32 %v369, 0.6931472
      %v371 = vlog2.pop %v359
      %v372 = vmul.f32 %v371, 0.6931472
      %v373 = vlog2.pop %v360
      %v374 = vmul.f32 %v373, 0.6931472
      %v375 = vlog2.pop %v361
      %v376 = vmul.f32 %v375, 0.6931472
      %v377 = vlog2.pop %v362
      %v378 = vmul.f32 %v377, 0.6931472
      %v387 = vcombine.low %v98, %v100
      %v388 = vcombine.high %v98, %v100
      %v389 = vcombine.low %v102, %v104
      %v390 = vcombine.high %v102, %v104
      %v392 = vunpack.c.l.s4 1983009808
      %v393 = vunpack.c.0.s8 %v392
      %v394 = vlaneseq
      %v395 = vshrl.u32 %v394, 7
      %v396 = vsub.s32 %v393, %v395
      %v397 = vrot.slane %v387, %v396
      %v399 = vunpack.c.l.s4 1983009808
      %v400 = vunpack.c.0.s8 %v399
      %v401 = vlaneseq
      %v402 = vshrl.u32 %v401, 7
      %v403 = vsub.s32 %v400, %v402
      %v404 = vrot.slane %v388, %v403
      %v406 = vunpack.c.l.s4 1983009808
      %v407 = vunpack.c.0.s8 %v406
      %v408 = vlaneseq
      %v409 = vshrl.u32 %v408, 7
      %v410 = vsub.s32 %v407, %v409
      %v411 = vrot.slane %v389, %v410
      %v413 = vunpack.c.l.s4 1983009808
      %v414 = vunpack.c.0.s8 %v413
      %v415 = vlaneseq
      %v416 = vshrl.u32 %v415, 7
      %v417 = vsub.s32 %v414, %v416
      %v418 = vrot.slane %v390, %v417
      %v419 = vcombine.low %v397, %v411
      %v420 = vcombine.high %v397, %v411
      %v421 = vcombine.low %v404, %v418
      %v422 = vcombine.high %v404, %v418
      %v423 = vcombine.low %v99, %v101
      %v424 = vcombine.high %v99, %v101
      %v425 = vcombine.low %v103, %v105
      %v426 = vcombine.high %v103, %v105
      %v428 = vunpack.c.l.s4 1983009808
      %v429 = vunpack.c.0.s8 %v428
      %v430 = vlaneseq
      %v431 = vshrl.u32 %v430, 7
      %v432 = vsub.s32 %v429, %v431
      %v433 = vrot.slane %v423, %v432
      %v435 = vunpack.c.l.s4 1983009808
      %v436 = vunpack.c.0.s8 %v435
      %v437 = vlaneseq
      %v438 = vshrl.u32 %v437, 7
      %v439 = vsub.s32 %v436, %v438
      %v440 = vrot.slane %v424, %v439
      %v442 = vunpack.c.l.s4 1983009808
      %v443 = vunpack.c.0.s8 %v442
      %v444 = vlaneseq
      %v445 = vshrl.u32 %v444, 7
      %v446 = vsub.s32 %v443, %v445
      %v447 = vrot.slane %v425, %v446
      %v449 = vunpack.c.l.s4 1983009808
      %v450 = vunpack.c.0.s8 %v449
      %v451 = vlaneseq
      %v452 = vshrl.u32 %v451, 7
      %v453 = vsub.s32 %v450, %v452
      %v454 = vrot.slane %v426, %v453
      %v455 = vcombine.low %v433, %v447
      %v456 = vcombine.high %v433, %v447
      %v457 = vcombine.low %v440, %v454
      %v458 = vcombine.high %v440, %v454
      %v467 = vmul.f32 %v364, %v419
      %v468 = vmul.f32 %v366, %v420
      %v469 = vmul.f32 %v368, %v421
      %v470 = vmul.f32 %v370, %v422
      %v471 = vmul.f32 %v372, %v455
      %v472 = vmul.f32 %v374, %v456
      %v473 = vmul.f32 %v376, %v457
      %v474 = vmul.f32 %v378, %v458
      %v475 = vsel %vm266, %v467, 0.0
      %v476 = vsel %vm266, %v468, 0.0
      %v477 = vsel %vm266, %v469, 0.0
      %v478 = vsel %vm266, %v470, 0.0
      %v479 = vsel %vm266, %v471, 0.0
      %v480 = vsel %vm266, %v472, 0.0
      %v481 = vsel %vm266, %v473, 0.0
      %v482 = vsel %vm266, %v474, 0.0
      %v483 = vld [vmem:[#allocation7] sm:$0xff]
      %v484 = vld [vmem:[#allocation7 + $0x8] sm:$0xff]
      %v485 = vld [vmem:[#allocation7 + $0x10] sm:$0xff]
      %v486 = vld [vmem:[#allocation7 + $0x18] sm:$0xff]
      %v487 = vld [vmem:[#allocation7 + $0x20] sm:$0xff]
      %v488 = vld [vmem:[#allocation7 + $0x28] sm:$0xff]
      %v489 = vld [vmem:[#allocation7 + $0x30] sm:$0xff]
      %v490 = vld [vmem:[#allocation7 + $0x38] sm:$0xff]
      %v491 = vadd.f32 %v475, 0.0
      %v492 = vadd.f32 %v476, 0.0
      %v493 = vadd.f32 %v477, 0.0
      %v494 = vadd.f32 %v478, 0.0
      %v495 = vadd.f32 %v479, 0.0
      %v496 = vadd.f32 %v480, 0.0
      %v497 = vadd.f32 %v481, 0.0
      %v498 = vadd.f32 %v482, 0.0
      %v499 = vadd.f32 %v483, %v491
      %v500 = vadd.f32 %v484, %v492
      %v501 = vadd.f32 %v485, %v493
      %v502 = vadd.f32 %v486, %v494
      %v503 = vadd.f32 %v487, %v495
      %v504 = vadd.f32 %v488, %v496
      %v505 = vadd.f32 %v489, %v497
      %v506 = vadd.f32 %v490, %v498
      %507 = vst [vmem:[#allocation7] sm:$0xff] %v499
      %508 = vst [vmem:[#allocation7 + $0x8] sm:$0xff] %v500
      %509 = vst [vmem:[#allocation7 + $0x10] sm:$0xff] %v501
      %510 = vst [vmem:[#allocation7 + $0x18] sm:$0xff] %v502
      %511 = vst [vmem:[#allocation7 + $0x20] sm:$0xff] %v503
      %512 = vst [vmem:[#allocation7 + $0x28] sm:$0xff] %v504
      %513 = vst [vmem:[#allocation7 + $0x30] sm:$0xff] %v505
      %514 = vst [vmem:[#allocation7 + $0x38] sm:$0xff] %v506
    $region29: #{tpu_custom_call.1} parent=1 // pred_fallthru
      _
    // Predicated region
    $region30: #{tpu_custom_call.1} parent=1 // pred_check
      _
    $region31: #{tpu_custom_call.1} parent=1 // pred_check_branch
      %516 = sbr.rel (0) target = $region33
    $region32: #{tpu_custom_call.1} parent=1 // pred_region
      %s518 = ssub.s32 1024, 1024
      %519 = vsyncadd [#allocation4], %s518
      %s521 = sshll.u32 [#allocation7], 4
      %s522 = int_to_ptr.vmem [resolvable:$true] %s521
      %524 = dma.vmem_to_hbm [thread:$0]  %s522, 1024, %s2, [#allocation4]
    $region33: #{tpu_custom_call.1} parent=1 // pred_fallthru
      _
    // Predicated region
    $region34: #{tpu_custom_call.1} parent=1 // pred_check
      _
    $region35: #{tpu_custom_call.1} parent=1 // pred_check_branch
      %526 = sbr.rel (0) target = $region37
    $region36: #{tpu_custom_call.1} parent=1 // pred_region
      %527 = dma.done [#allocation4], 1024
    $region37: #{tpu_custom_call.1} parent=1 // pred_fallthru
      _
    %528 = vsyncpa [#allocation3], 1
    %529 = vsyncpa [#allocation6], 1
    %530 = vsyncpa [#allocation4], 1

</llo_original>
